<compile_context>
chip_gen: v7x
topology: tpu7x:2x2x1
jax: 0.10.0
libtpu: 0.0.40
codegen_flags: <defaults>
</compile_context>

<pallas_src>
import functools

import jax
import jax.numpy as jnp
from jax.experimental import pallas as pl
from jax.experimental.pallas import tpu as pltpu

# -----------------------------------------------------------------------------
# Network dims (from the PyTorch module)
# -----------------------------------------------------------------------------
D_IN, D_H1, D_H2, D_H3, D_OUT = 2, 64, 128, 64, 2
D_OUT_PAD = 8          # layer-4 output rows padded to one sublane group
LANE = 128             # lane width: batch tiles are multiples of this
TB_MAX = 2048          # default max batch tile; sweep 1024/2048/4096 per chip


def _cdiv(a, b):
    return -(-a // b)


def _round_up(n, m):
    return _cdiv(n, m) * m


# -----------------------------------------------------------------------------
# Pallas kernel: full 4-layer MLP for one feature-major batch tile
#   xT_ref : (2, TB) f32      o_ref : (8, TB) f32 (rows 2..7 are zero)
# -----------------------------------------------------------------------------
def mlp_kernel(xT_ref, w1t_ref, b1_ref, w2t_ref, b2_ref,
               w3t_ref, b3_ref, w4t_ref, b4_ref, o_ref):
    xT = xT_ref[...]                                           # (2, TB) f32

    # Layer 1: K == 2 -> two VPU broadcast mul-adds (no padded MXU matmul).
    h = (w1t_ref[:, 0:1] * xT[0:1, :]
         + w1t_ref[:, 1:2] * xT[1:2, :]
         + b1_ref[...])                                        # (64, TB) f32
    h = jnp.maximum(h, 0.0)

    # Layers 2/3: bf16 MXU matmuls, f32 accumulation, batch on the N (lane) dim.
    h = jnp.dot(w2t_ref[...], h.astype(jnp.bfloat16),
                preferred_element_type=jnp.float32) + b2_ref[...]
    h = jnp.maximum(h, 0.0)                                    # (128, TB) f32
    h = jnp.dot(w3t_ref[...], h.astype(jnp.bfloat16),
                preferred_element_type=jnp.float32) + b3_ref[...]
    h = jnp.maximum(h, 0.0)                                    # (64, TB) f32

    # Layer 4: 8 (padded from 2) output rows — negligible MXU cost in this form.
    o = jnp.dot(w4t_ref[...], h.astype(jnp.bfloat16),
                preferred_element_type=jnp.float32) + b4_ref[...]
    o_ref[...] = o.astype(o_ref.dtype)                         # (8, TB)


# -----------------------------------------------------------------------------
# Parameter preparation (hoisted out of the per-call path; call once)
# -----------------------------------------------------------------------------
def prepare_params(params):
    """Transpose to feature-major, pre-cast MXU weights to bf16, pad layer 4."""
    (w1, b1), (w2, b2), (w3, b3), (w4, b4) = params
    f32, bf16 = jnp.float32, jnp.bfloat16
    w4t = jnp.zeros((D_OUT_PAD, D_H3), bf16).at[:D_OUT, :].set(w4.T.astype(bf16))
    b4c = jnp.zeros((D_OUT_PAD, 1), f32).at[:D_OUT, 0].set(b4.astype(f32))
    return (w1.T.astype(f32),  b1.reshape(D_H1, 1).astype(f32),   # layer 1 (VPU, f32)
            w2.T.astype(bf16), b2.reshape(D_H2, 1).astype(f32),   # layer 2 (MXU, bf16)
            w3.T.astype(bf16), b3.reshape(D_H3, 1).astype(f32),   # layer 3 (MXU, bf16)
            w4t, b4c)                                             # layer 4 (padded)


# -----------------------------------------------------------------------------
# Wrapper
# -----------------------------------------------------------------------------
@functools.partial(jax.jit, static_argnames=("tb_max",))
def bcnet_forward(x, prepared, tb_max=TB_MAX):
    """x: (B, 2) float32 -> (B, 2) float32."""
    assert tb_max % LANE == 0, "tb_max must be a multiple of 128"
    w1t, b1, w2t, b2, w3t, b3, w4t, b4 = prepared
    B = x.shape[0]

    # Adaptive, lane-aligned batch tiling: keep the padded tail small and give
    # v7x's two TensorCores at least 2 grid steps once the batch is big enough.
    n_tiles = max(_cdiv(B, tb_max), 2 if B >= 2 * LANE else 1)
    tb = _round_up(_cdiv(B, n_tiles), LANE)
    Bp = n_tiles * tb

    xT = x.astype(jnp.float32).T                       # (2, B): batch -> lanes
    if Bp != B:
        xT = jnp.pad(xT, ((0, 0), (0, Bp - B)))

    const = lambda shape: pl.BlockSpec(shape, lambda i: (0, 0))

    out = pl.pallas_call(
        mlp_kernel,
        out_shape=jax.ShapeDtypeStruct((D_OUT_PAD, Bp), jnp.float32),
        grid_spec=pltpu.PrefetchScalarGridSpec(
            num_scalar_prefetch=0,
            grid=(n_tiles,),
            in_specs=[
                pl.BlockSpec((D_IN, tb), lambda i: (0, i)),        # x^T tile
                const((D_H1, D_IN)), const((D_H1, 1)),             # layer 1
                const((D_H2, D_H1)), const((D_H2, 1)),             # layer 2
                const((D_H3, D_H2)), const((D_H3, 1)),             # layer 3
                const((D_OUT_PAD, D_H3)), const((D_OUT_PAD, 1)),   # layer 4
            ],
            out_specs=pl.BlockSpec((D_OUT_PAD, tb), lambda i: (0, i)),
        ),
        compiler_params=pltpu.CompilerParams(
            dimension_semantics=("parallel",)),
    )(xT, w1t, b1, w2t, b2, w3t, b3, w4t, b4)

    return out[:D_OUT, :B].T                           # back to (B, 2)


# -----------------------------------------------------------------------------
# Deterministic parameter init (PyTorch-style uniform(-1/sqrt(fan_in), ...))
# -----------------------------------------------------------------------------
def init_params(key):
    dims = [(D_IN, D_H1), (D_H1, D_H2), (D_H2, D_H3), (D_H3, D_OUT)]
    params = []
    for (fan_in, fan_out) in dims:
        key, kw, kb = jax.random.split(key, 3)
        bound = 1.0 / jnp.sqrt(float(fan_in))
        w = jax.random.uniform(kw, (fan_in, fan_out), jnp.float32, -bound, bound)
        b = jax.random.uniform(kb, (fan_out,), jnp.float32, -bound, bound)
        params.append((w, b))
    return params


def reference_forward(x, params):
    h = x
    for i, (w, b) in enumerate(params):
        h = h @ w + b
        if i < len(params) - 1:
            h = jnp.maximum(h, 0.0)
    return h


if __name__ == "__main__":
    key = jax.random.PRNGKey(0)
    key, kx1, kx2 = jax.random.split(key, 3)
    params = init_params(key)
    prepared = prepare_params(params)

    # bf16 MXU operands -> loosened tolerance vs the f32 reference.
    ATOL = RTOL = 5e-2

    # Small batch: single grid step (one 128-lane tile, batch padded 8 -> 128).
    x1 = jax.random.normal(kx1, (8, D_IN), jnp.float32)
    out1 = bcnet_forward(x1, prepared)
    jax.block_until_ready(out1)
    ref1 = reference_forward(x1, params)
    assert out1.shape == (8, D_OUT)
    assert jnp.allclose(out1, ref1, atol=ATOL, rtol=RTOL), (
        f"max abs err {jnp.max(jnp.abs(out1 - ref1))}")

    # Ragged batch with a small tile cap: multi-step grid + lane padding.
    x2 = jax.random.normal(kx2, (300, D_IN), jnp.float32)
    out2 = bcnet_forward(x2, prepared, tb_max=128)
    jax.block_until_ready(out2)
    ref2 = reference_forward(x2, params)
    assert out2.shape == (300, D_OUT)
    assert jnp.allclose(out2, ref2, atol=ATOL, rtol=RTOL), (
        f"max abs err {jnp.max(jnp.abs(out2 - ref2))}")

    print("KERNEL_OK")
</pallas_src>

<mosaic_0001>
module attributes {stable_mosaic.version = 11 : i64} {
  func.func @mlp_kernel(%arg0: i32, %arg1: memref<2x128xf32, #tpu.memory_space<vmem>>, %arg2: memref<64x2xf32, #tpu.memory_space<vmem>>, %arg3: memref<64x1xf32, #tpu.memory_space<vmem>>, %arg4: memref<128x64xbf16, #tpu.memory_space<vmem>>, %arg5: memref<128x1xf32, #tpu.memory_space<vmem>>, %arg6: memref<64x128xbf16, #tpu.memory_space<vmem>>, %arg7: memref<64x1xf32, #tpu.memory_space<vmem>>, %arg8: memref<8x64xbf16, #tpu.memory_space<vmem>>, %arg9: memref<8x1xf32, #tpu.memory_space<vmem>>, %arg10: memref<8x128xf32, #tpu.memory_space<vmem>>) attributes {dimension_semantics = [#tpu.dimension_semantics<parallel>], iteration_bounds = array<i64: 1>, scalar_prefetch = 0 : i64, scratch_operands = 0 : i64, tpu.core_type = #tpu.core_type<tc>, window_params = [{transform_indices = @transform_0, window_bounds = array<i64: 2, 128>}, {pipeline_mode = #tpu.pipeline_mode<synchronous>, transform_indices = @transform_1, window_bounds = array<i64: 64, 2>}, {pipeline_mode = #tpu.pipeline_mode<synchronous>, transform_indices = @transform_2, window_bounds = array<i64: 64, 1>}, {pipeline_mode = #tpu.pipeline_mode<synchronous>, transform_indices = @transform_3, window_bounds = array<i64: 128, 64>}, {pipeline_mode = #tpu.pipeline_mode<synchronous>, transform_indices = @transform_4, window_bounds = array<i64: 128, 1>}, {pipeline_mode = #tpu.pipeline_mode<synchronous>, transform_indices = @transform_5, window_bounds = array<i64: 64, 128>}, {pipeline_mode = #tpu.pipeline_mode<synchronous>, transform_indices = @transform_6, window_bounds = array<i64: 64, 1>}, {pipeline_mode = #tpu.pipeline_mode<synchronous>, transform_indices = @transform_7, window_bounds = array<i64: 8, 64>}, {pipeline_mode = #tpu.pipeline_mode<synchronous>, transform_indices = @transform_8, window_bounds = array<i64: 8, 1>}, {transform_indices = @transform_9, window_bounds = array<i64: 8, 128>}]} {
    %c0 = arith.constant 0 : index
    %c0_0 = arith.constant 0 : index
    %0 = vector.load %arg1[%c0, %c0_0] : memref<2x128xf32, #tpu.memory_space<vmem>>, vector<2x128xf32>
    %c0_1 = arith.constant 0 : index
    %c0_2 = arith.constant 0 : index
    %1 = vector.load %arg2[%c0_1, %c0_2] : memref<64x2xf32, #tpu.memory_space<vmem>>, vector<64x1xf32>
    %2 = vector.extract_strided_slice %0 {offsets = [0, 0], sizes = [1, 128], strides = [1, 1]} : vector<2x128xf32> to vector<1x128xf32>
    %3 = vector.broadcast %1 : vector<64x1xf32> to vector<64x128xf32>
    %4 = vector.broadcast %2 : vector<1x128xf32> to vector<64x128xf32>
    %5 = arith.mulf %3, %4 : vector<64x128xf32>
    %c0_3 = arith.constant 0 : index
    %c1 = arith.constant 1 : index
    %6 = vector.load %arg2[%c0_3, %c1] : memref<64x2xf32, #tpu.memory_space<vmem>>, vector<64x1xf32>
    %7 = vector.extract_strided_slice %0 {offsets = [1, 0], sizes = [1, 128], strides = [1, 1]} : vector<2x128xf32> to vector<1x128xf32>
    %8 = vector.broadcast %6 : vector<64x1xf32> to vector<64x128xf32>
    %9 = vector.broadcast %7 : vector<1x128xf32> to vector<64x128xf32>
    %10 = arith.mulf %8, %9 : vector<64x128xf32>
    %11 = arith.addf %5, %10 : vector<64x128xf32>
    %c0_4 = arith.constant 0 : index
    %c0_5 = arith.constant 0 : index
    %12 = vector.load %arg3[%c0_4, %c0_5] : memref<64x1xf32, #tpu.memory_space<vmem>>, vector<64x1xf32>
    %13 = vector.broadcast %12 : vector<64x1xf32> to vector<64x128xf32>
    %14 = arith.addf %11, %13 : vector<64x128xf32>
    %cst = arith.constant 0.000000e+00 : f32
    %15 = vector.broadcast %cst : f32 to vector<64x128xf32>
    %16 = arith.maximumf %14, %15 : vector<64x128xf32>
    %c0_6 = arith.constant 0 : index
    %c0_7 = arith.constant 0 : index
    %17 = vector.load %arg4[%c0_6, %c0_7] : memref<128x64xbf16, #tpu.memory_space<vmem>>, vector<128x64xbf16>
    %18 = arith.truncf %16 : vector<64x128xf32> to vector<64x128xbf16>
    %cst_8 = arith.constant dense<0.000000e+00> : vector<128x128xf32>
    %19 = tpu.matmul %17, %18, %cst_8 {dimension_numbers = #tpu.dot_dimension_numbers<[1], [0], [0], [1], [0, 0, 1, 1], [], []>} : vector<128x64xbf16>, vector<64x128xbf16>, vector<128x128xf32> -> vector<128x128xf32>
    %c0_9 = arith.constant 0 : index
    %c0_10 = arith.constant 0 : index
    %20 = vector.load %arg5[%c0_9, %c0_10] : memref<128x1xf32, #tpu.memory_space<vmem>>, vector<128x1xf32>
    %21 = vector.broadcast %20 : vector<128x1xf32> to vector<128x128xf32>
    %22 = arith.addf %19, %21 : vector<128x128xf32>
    %cst_11 = arith.constant 0.000000e+00 : f32
    %23 = vector.broadcast %cst_11 : f32 to vector<128x128xf32>
    %24 = arith.maximumf %22, %23 : vector<128x128xf32>
    %c0_12 = arith.constant 0 : index
    %c0_13 = arith.constant 0 : index
    %25 = vector.load %arg6[%c0_12, %c0_13] : memref<64x128xbf16, #tpu.memory_space<vmem>>, vector<64x128xbf16>
    %26 = arith.truncf %24 : vector<128x128xf32> to vector<128x128xbf16>
    %cst_14 = arith.constant dense<0.000000e+00> : vector<64x128xf32>
    %27 = tpu.matmul %25, %26, %cst_14 {dimension_numbers = #tpu.dot_dimension_numbers<[1], [0], [0], [1], [0, 0, 1, 1], [], []>} : vector<64x128xbf16>, vector<128x128xbf16>, vector<64x128xf32> -> vector<64x128xf32>
    %c0_15 = arith.constant 0 : index
    %c0_16 = arith.constant 0 : index
    %28 = vector.load %arg7[%c0_15, %c0_16] : memref<64x1xf32, #tpu.memory_space<vmem>>, vector<64x1xf32>
    %29 = vector.broadcast %28 : vector<64x1xf32> to vector<64x128xf32>
    %30 = arith.addf %27, %29 : vector<64x128xf32>
    %cst_17 = arith.constant 0.000000e+00 : f32
    %31 = vector.broadcast %cst_17 : f32 to vector<64x128xf32>
    %32 = arith.maximumf %30, %31 : vector<64x128xf32>
    %c0_18 = arith.constant 0 : index
    %c0_19 = arith.constant 0 : index
    %33 = vector.load %arg8[%c0_18, %c0_19] : memref<8x64xbf16, #tpu.memory_space<vmem>>, vector<8x64xbf16>
    %34 = arith.truncf %32 : vector<64x128xf32> to vector<64x128xbf16>
    %cst_20 = arith.constant dense<0.000000e+00> : vector<8x128xf32>
    %35 = tpu.matmul %33, %34, %cst_20 {dimension_numbers = #tpu.dot_dimension_numbers<[1], [0], [0], [1], [0, 0, 1, 1], [], []>} : vector<8x64xbf16>, vector<64x128xbf16>, vector<8x128xf32> -> vector<8x128xf32>
    %c0_21 = arith.constant 0 : index
    %c0_22 = arith.constant 0 : index
    %36 = vector.load %arg9[%c0_21, %c0_22] : memref<8x1xf32, #tpu.memory_space<vmem>>, vector<8x1xf32>
    %37 = vector.broadcast %36 : vector<8x1xf32> to vector<8x128xf32>
    %38 = arith.addf %35, %37 : vector<8x128xf32>
    %c0_23 = arith.constant 0 : index
    %c0_24 = arith.constant 0 : index
    %39 = vector.load %arg10[%c0_23, %c0_24] : memref<8x128xf32, #tpu.memory_space<vmem>>, vector<8x128xf32>
    tpu.vector_store %arg10[%c0_23, %c0_24], %38 {strides = array<i32>} : memref<8x128xf32, #tpu.memory_space<vmem>>, vector<8x128xf32>,
    return
  }
  func.func @transform_0(%arg0: i32) -> (i32, i32) {
    %c0_i32 = arith.constant 0 : i32
    %c0_i32_0 = arith.constant 0 : i32
    return %c0_i32, %arg0 : i32, i32
  }
  func.func @transform_1(%arg0: i32) -> (i32, i32) {
    %c0_i32 = arith.constant 0 : i32
    %c0_i32_0 = arith.constant 0 : i32
    %c0_i32_1 = arith.constant 0 : i32
    return %c0_i32, %c0_i32_0 : i32, i32
  }
  func.func @transform_2(%arg0: i32) -> (i32, i32) {
    %c0_i32 = arith.constant 0 : i32
    %c0_i32_0 = arith.constant 0 : i32
    %c0_i32_1 = arith.constant 0 : i32
    return %c0_i32, %c0_i32_0 : i32, i32
  }
  func.func @transform_3(%arg0: i32) -> (i32, i32) {
    %c0_i32 = arith.constant 0 : i32
    %c0_i32_0 = arith.constant 0 : i32
    %c0_i32_1 = arith.constant 0 : i32
    return %c0_i32, %c0_i32_0 : i32, i32
  }
  func.func @transform_4(%arg0: i32) -> (i32, i32) {
    %c0_i32 = arith.constant 0 : i32
    %c0_i32_0 = arith.constant 0 : i32
    %c0_i32_1 = arith.constant 0 : i32
    return %c0_i32, %c0_i32_0 : i32, i32
  }
  func.func @transform_5(%arg0: i32) -> (i32, i32) {
    %c0_i32 = arith.constant 0 : i32
    %c0_i32_0 = arith.constant 0 : i32
    %c0_i32_1 = arith.constant 0 : i32
    return %c0_i32, %c0_i32_0 : i32, i32
  }
  func.func @transform_6(%arg0: i32) -> (i32, i32) {
    %c0_i32 = arith.constant 0 : i32
    %c0_i32_0 = arith.constant 0 : i32
    %c0_i32_1 = arith.constant 0 : i32
    return %c0_i32, %c0_i32_0 : i32, i32
  }
  func.func @transform_7(%arg0: i32) -> (i32, i32) {
    %c0_i32 = arith.constant 0 : i32
    %c0_i32_0 = arith.constant 0 : i32
    %c0_i32_1 = arith.constant 0 : i32
    return %c0_i32, %c0_i32_0 : i32, i32
  }
  func.func @transform_8(%arg0: i32) -> (i32, i32) {
    %c0_i32 = arith.constant 0 : i32
    %c0_i32_0 = arith.constant 0 : i32
    %c0_i32_1 = arith.constant 0 : i32
    return %c0_i32, %c0_i32_0 : i32, i32
  }
  func.func @transform_9(%arg0: i32) -> (i32, i32) {
    %c0_i32 = arith.constant 0 : i32
    %c0_i32_0 = arith.constant 0 : i32
    return %c0_i32, %arg0 : i32, i32
  }
}

</mosaic_0001>

<llo_original>
// kernel: bcnet_forward.1
$region0: #{bcnet_forward.1}
  #allocation0 [shape = 'u32[]', space=smem, size = 0x4, offset = 0x4, fixed_abs, tag = 'smem constant byte address 0x4 - core index']
  #allocation1 [shape = 'u32[144,128]{1,0:T(1,128)}', space=vmem, size = 0x12000, scoped, tag = 'internal scratch']
  %s0 = inlined_call_operand.vmem [shape: f32[2,128], index: 0, kind: input, shape index: {}]
  %s1 = inlined_call_operand.vmem [shape: f32[64,2], index: 1, kind: input, shape index: {}]
  %s2 = inlined_call_operand.vmem [shape: f32[64,1], index: 2, kind: input, shape index: {}]
  %s3 = inlined_call_operand.vmem [shape: bf16[128,64], index: 3, kind: input, shape index: {}]
  %s4 = inlined_call_operand.vmem [shape: f32[128,1], index: 4, kind: input, shape index: {}]
  %s5 = inlined_call_operand.vmem [shape: bf16[64,128], index: 5, kind: input, shape index: {}]
  %s6 = inlined_call_operand.vmem [shape: f32[64,1], index: 6, kind: input, shape index: {}]
  %s7 = inlined_call_operand.vmem [shape: bf16[8,64], index: 7, kind: input, shape index: {}]
  %s8 = inlined_call_operand.vmem [shape: f32[8,1], index: 8, kind: input, shape index: {}]
  %s9 = inlined_call_operand.vmem [shape: f32[8,128], index: 9, kind: output, shape index: {}]
  %s10 = sld [smem:[#allocation0]]
  $region46: #{bcnet_forward.1} parent=0
    _
  %s12 = ssub.s32 1, %s10
  %s13 = scalar_select 0, %s12, %s10
  // Predicated region
  $region2: #{bcnet_forward.1} parent=0 // pred_check
    _
  $region3: #{bcnet_forward.1} parent=0 // pred_check_branch
    %15 = sbr.rel (0) target = $region5
  $region4: #{bcnet_forward.1} parent=0 // pred_region
    _
  $region5: #{bcnet_forward.1} parent=0 // pred_fallthru
    _
  // Predicated region
  $region6: #{bcnet_forward.1} parent=0 // pred_check
    _
  $region7: #{bcnet_forward.1} parent=0 // pred_check_branch
    %17 = sbr.rel (0) target = $region9
  $region8: #{bcnet_forward.1} parent=0 // pred_region
    _
  $region9: #{bcnet_forward.1} parent=0 // pred_fallthru
    _
  // Predicated region
  $region10: #{bcnet_forward.1} parent=0 // pred_check
    _
  $region11: #{bcnet_forward.1} parent=0 // pred_check_branch
    %19 = sbr.rel (0) target = $region13
  $region12: #{bcnet_forward.1} parent=0 // pred_region
    _
  $region13: #{bcnet_forward.1} parent=0 // pred_fallthru
    _
  // Predicated region
  $region14: #{bcnet_forward.1} parent=0 // pred_check
    _
  $region15: #{bcnet_forward.1} parent=0 // pred_check_branch
    %21 = sbr.rel (0) target = $region17
  $region16: #{bcnet_forward.1} parent=0 // pred_region
    _
  $region17: #{bcnet_forward.1} parent=0 // pred_fallthru
    _
  // Predicated region
  $region18: #{bcnet_forward.1} parent=0 // pred_check
    _
  $region19: #{bcnet_forward.1} parent=0 // pred_check_branch
    %23 = sbr.rel (0) target = $region21
  $region20: #{bcnet_forward.1} parent=0 // pred_region
    _
  $region21: #{bcnet_forward.1} parent=0 // pred_fallthru
    _
  // Predicated region
  $region22: #{bcnet_forward.1} parent=0 // pred_check
    _
  $region23: #{bcnet_forward.1} parent=0 // pred_check_branch
    %25 = sbr.rel (0) target = $region25
  $region24: #{bcnet_forward.1} parent=0 // pred_region
    _
  $region25: #{bcnet_forward.1} parent=0 // pred_fallthru
    _
  // Predicated region
  $region26: #{bcnet_forward.1} parent=0 // pred_check
    _
  $region27: #{bcnet_forward.1} parent=0 // pred_check_branch
    %27 = sbr.rel (0) target = $region29
  $region28: #{bcnet_forward.1} parent=0 // pred_region
    _
  $region29: #{bcnet_forward.1} parent=0 // pred_fallthru
    _
  // Predicated region
  $region30: #{bcnet_forward.1} parent=0 // pred_check
    _
  $region31: #{bcnet_forward.1} parent=0 // pred_check_branch
    %29 = sbr.rel (0) target = $region33
  $region32: #{bcnet_forward.1} parent=0 // pred_region
    _
  $region33: #{bcnet_forward.1} parent=0 // pred_fallthru
    _
  // Predicated region
  $region34: #{bcnet_forward.1} parent=0 // pred_check
    _
  $region35: #{bcnet_forward.1} parent=0 // pred_check_branch
    %31 = sbr.rel (0) target = $region37
  $region36: #{bcnet_forward.1} parent=0 // pred_region
    _
  $region37: #{bcnet_forward.1} parent=0 // pred_fallthru
    _
  %v33 = vld [vmem:[%s0] sm:$0x3]
  %v34 = vld [vmem:[%s1] sm:$0xff]
  %v35 = vld [vmem:[%s1 + $0x8] sm:$0xff]
  %v36 = vld [vmem:[%s1 + $0x10] sm:$0xff]
  %v37 = vld [vmem:[%s1 + $0x18] sm:$0xff]
  %v38 = vld [vmem:[%s1 + $0x20] sm:$0xff]
  %v39 = vld [vmem:[%s1 + $0x28] sm:$0xff]
  %v40 = vld [vmem:[%s1 + $0x30] sm:$0xff]
  %v41 = vld [vmem:[%s1 + $0x38] sm:$0xff]
  %43 = vset.pattern.permute.xlu0 0
  %44 = vperm.xlu0 %43, %v34
  %v45 = vpop.permute.xlu0 %44
  %48 = vset.pattern.permute.xlu0 0
  %49 = vperm.xlu0 %48, %v35
  %v50 = vpop.permute.xlu0 %49
  %53 = vset.pattern.permute.xlu0 0
  %54 = vperm.xlu0 %53, %v36
  %v55 = vpop.permute.xlu0 %54
  %58 = vset.pattern.permute.xlu0 0
  %59 = vperm.xlu0 %58, %v37
  %v60 = vpop.permute.xlu0 %59
  %63 = vset.pattern.permute.xlu0 0
  %64 = vperm.xlu0 %63, %v38
  %v65 = vpop.permute.xlu0 %64
  %68 = vset.pattern.permute.xlu0 0
  %69 = vperm.xlu0 %68, %v39
  %v70 = vpop.permute.xlu0 %69
  %73 = vset.pattern.permute.xlu0 0
  %74 = vperm.xlu0 %73, %v40
  %v75 = vpop.permute.xlu0 %74
  %78 = vset.pattern.permute.xlu0 0
  %79 = vperm.xlu0 %78, %v41
  %v80 = vpop.permute.xlu0 %79
  %v82 = vlaneseq
  %v83 = vshrl.u32 %v82, 7
  %v84 = vsub.s32 0, %v83
  %v85 = vrot.slane %v33, %v84
  %v86 = vmul.f32 %v45, %v85
  %v87 = vmul.f32 %v50, %v85
  %v88 = vmul.f32 %v55, %v85
  %v89 = vmul.f32 %v60, %v85
  %v90 = vmul.f32 %v65, %v85
  %v91 = vmul.f32 %v70, %v85
  %v92 = vmul.f32 %v75, %v85
  %v93 = vmul.f32 %v80, %v85
  %94 = vset.pattern.permute.xlu0 1
  %95 = vperm.xlu0 %94, %v34
  %v96 = vpop.permute.xlu0 %95
  %98 = vset.pattern.permute.xlu0 1
  %99 = vperm.xlu0 %98, %v35
  %v100 = vpop.permute.xlu0 %99
  %102 = vset.pattern.permute.xlu0 1
  %103 = vperm.xlu0 %102, %v36
  %v104 = vpop.permute.xlu0 %103
  %106 = vset.pattern.permute.xlu0 1
  %107 = vperm.xlu0 %106, %v37
  %v108 = vpop.permute.xlu0 %107
  %110 = vset.pattern.permute.xlu0 1
  %111 = vperm.xlu0 %110, %v38
  %v112 = vpop.permute.xlu0 %111
  %114 = vset.pattern.permute.xlu0 1
  %115 = vperm.xlu0 %114, %v39
  %v116 = vpop.permute.xlu0 %115
  %118 = vset.pattern.permute.xlu0 1
  %119 = vperm.xlu0 %118, %v40
  %v120 = vpop.permute.xlu0 %119
  %122 = vset.pattern.permute.xlu0 1
  %123 = vperm.xlu0 %122, %v41
  %v124 = vpop.permute.xlu0 %123
  %v126 = vlaneseq
  %v127 = vshrl.u32 %v126, 7
  %v128 = vsub.s32 1, %v127
  %v129 = vrot.slane %v33, %v128
  %v130 = vmul.f32 %v96, %v129
  %v131 = vmul.f32 %v100, %v129
  %v132 = vmul.f32 %v104, %v129
  %v133 = vmul.f32 %v108, %v129
  %v134 = vmul.f32 %v112, %v129
  %v135 = vmul.f32 %v116, %v129
  %v136 = vmul.f32 %v120, %v129
  %v137 = vmul.f32 %v124, %v129
  %v138 = vadd.f32 %v86, %v130
  %v139 = vadd.f32 %v87, %v131
  %v140 = vadd.f32 %v88, %v132
  %v141 = vadd.f32 %v89, %v133
  %v142 = vadd.f32 %v90, %v134
  %v143 = vadd.f32 %v91, %v135
  %v144 = vadd.f32 %v92, %v136
  %v145 = vadd.f32 %v93, %v137
  %v146 = vld [vmem:[%s2] sm:$0xff]
  %v147 = vld [vmem:[%s2 + $0x8] sm:$0xff]
  %v148 = vld [vmem:[%s2 + $0x10] sm:$0xff]
  %v149 = vld [vmem:[%s2 + $0x18] sm:$0xff]
  %v150 = vld [vmem:[%s2 + $0x20] sm:$0xff]
  %v151 = vld [vmem:[%s2 + $0x28] sm:$0xff]
  %v152 = vld [vmem:[%s2 + $0x30] sm:$0xff]
  %v153 = vld [vmem:[%s2 + $0x38] sm:$0xff]
  %155 = vset.pattern.permute.xlu0 0
  %156 = vperm.xlu0 %155, %v146
  %v157 = vpop.permute.xlu0 %156
  %160 = vset.pattern.permute.xlu0 0
  %161 = vperm.xlu0 %160, %v147
  %v162 = vpop.permute.xlu0 %161
  %165 = vset.pattern.permute.xlu0 0
  %166 = vperm.xlu0 %165, %v148
  %v167 = vpop.permute.xlu0 %166
  %170 = vset.pattern.permute.xlu0 0
  %171 = vperm.xlu0 %170, %v149
  %v172 = vpop.permute.xlu0 %171
  %175 = vset.pattern.permute.xlu0 0
  %176 = vperm.xlu0 %175, %v150
  %v177 = vpop.permute.xlu0 %176
  %180 = vset.pattern.permute.xlu0 0
  %181 = vperm.xlu0 %180, %v151
  %v182 = vpop.permute.xlu0 %181
  %185 = vset.pattern.permute.xlu0 0
  %186 = vperm.xlu0 %185, %v152
  %v187 = vpop.permute.xlu0 %186
  %190 = vset.pattern.permute.xlu0 0
  %191 = vperm.xlu0 %190, %v153
  %v192 = vpop.permute.xlu0 %191
  %v194 = vadd.f32 %v138, %v157
  %v195 = vadd.f32 %v139, %v162
  %v196 = vadd.f32 %v140, %v167
  %v197 = vadd.f32 %v141, %v172
  %v198 = vadd.f32 %v142, %v177
  %v199 = vadd.f32 %v143, %v182
  %v200 = vadd.f32 %v144, %v187
  %v201 = vadd.f32 %v145, %v192
  %v202 = vmax.f32 %v194, 0.0
  %v203 = vmax.f32 %v195, 0.0
  %v204 = vmax.f32 %v196, 0.0
  %v205 = vmax.f32 %v197, 0.0
  %v206 = vmax.f32 %v198, 0.0
  %v207 = vmax.f32 %v199, 0.0
  %v208 = vmax.f32 %v200, 0.0
  %v209 = vmax.f32 %v201, 0.0
  %v210 = vld [vmem:[%s3] sm:$0xf]
  %v211 = vld [vmem:[%s3 + $0x4] sm:$0xf]
  %v212 = vld [vmem:[%s3 + $0x8] sm:$0xf]
  %v213 = vld [vmem:[%s3 + $0xc] sm:$0xf]
  %v214 = vld [vmem:[%s3 + $0x10] sm:$0xf]
  %v215 = vld [vmem:[%s3 + $0x14] sm:$0xf]
  %v216 = vld [vmem:[%s3 + $0x18] sm:$0xf]
  %v217 = vld [vmem:[%s3 + $0x1c] sm:$0xf]
  %v218 = vld [vmem:[%s3 + $0x20] sm:$0xf]
  %v219 = vld [vmem:[%s3 + $0x24] sm:$0xf]
  %v220 = vld [vmem:[%s3 + $0x28] sm:$0xf]
  %v221 = vld [vmem:[%s3 + $0x2c] sm:$0xf]
  %v222 = vld [vmem:[%s3 + $0x30] sm:$0xf]
  %v223 = vld [vmem:[%s3 + $0x34] sm:$0xf]
  %v224 = vld [vmem:[%s3 + $0x38] sm:$0xf]
  %v225 = vld [vmem:[%s3 + $0x3c] sm:$0xf]
  %v226 = vpack.c.bf16 %v203, %v202
  %v227 = vpack.c.bf16 %v205, %v204
  %v228 = vpack.c.bf16 %v207, %v206
  %v229 = vpack.c.bf16 %v209, %v208
  %v230 = vld [vmem:[%s4] sm:$0xff]
  %v231 = vld [vmem:[%s4 + $0x8] sm:$0xff]
  %v232 = vld [vmem:[%s4 + $0x10] sm:$0xff]
  %v233 = vld [vmem:[%s4 + $0x18] sm:$0xff]
  %v234 = vld [vmem:[%s4 + $0x20] sm:$0xff]
  %v235 = vld [vmem:[%s4 + $0x28] sm:$0xff]
  %v236 = vld [vmem:[%s4 + $0x30] sm:$0xff]
  %v237 = vld [vmem:[%s4 + $0x38] sm:$0xff]
  %v238 = vld [vmem:[%s4 + $0x40] sm:$0xff]
  %v239 = vld [vmem:[%s4 + $0x48] sm:$0xff]
  %v240 = vld [vmem:[%s4 + $0x50] sm:$0xff]
  %v241 = vld [vmem:[%s4 + $0x58] sm:$0xff]
  %v242 = vld [vmem:[%s4 + $0x60] sm:$0xff]
  %v243 = vld [vmem:[%s4 + $0x68] sm:$0xff]
  %v244 = vld [vmem:[%s4 + $0x70] sm:$0xff]
  %v245 = vld [vmem:[%s4 + $0x78] sm:$0xff]
  %247 = vset.pattern.permute.xlu0 0
  %248 = vperm.xlu0 %247, %v230
  %v249 = vpop.permute.xlu0 %248
  %252 = vset.pattern.permute.xlu0 0
  %253 = vperm.xlu0 %252, %v231
  %v254 = vpop.permute.xlu0 %253
  %257 = vset.pattern.permute.xlu0 0
  %258 = vperm.xlu0 %257, %v232
  %v259 = vpop.permute.xlu0 %258
  %262 = vset.pattern.permute.xlu0 0
  %263 = vperm.xlu0 %262, %v233
  %v264 = vpop.permute.xlu0 %263
  %267 = vset.pattern.permute.xlu0 0
  %268 = vperm.xlu0 %267, %v234
  %v269 = vpop.permute.xlu0 %268
  %272 = vset.pattern.permute.xlu0 0
  %273 = vperm.xlu0 %272, %v235
  %v274 = vpop.permute.xlu0 %273
  %277 = vset.pattern.permute.xlu0 0
  %278 = vperm.xlu0 %277, %v236
  %v279 = vpop.permute.xlu0 %278
  %282 = vset.pattern.permute.xlu0 0
  %283 = vperm.xlu0 %282, %v237
  %v284 = vpop.permute.xlu0 %283
  %287 = vset.pattern.permute.xlu0 0
  %288 = vperm.xlu0 %287, %v238
  %v289 = vpop.permute.xlu0 %288
  %292 = vset.pattern.permute.xlu0 0
  %293 = vperm.xlu0 %292, %v239
  %v294 = vpop.permute.xlu0 %293
  %297 = vset.pattern.permute.xlu0 0
  %298 = vperm.xlu0 %297, %v240
  %v299 = vpop.permute.xlu0 %298
  %302 = vset.pattern.permute.xlu0 0
  %303 = vperm.xlu0 %302, %v241
  %v304 = vpop.permute.xlu0 %303
  %307 = vset.pattern.permute.xlu0 0
  %308 = vperm.xlu0 %307, %v242
  %v309 = vpop.permute.xlu0 %308
  %312 = vset.pattern.permute.xlu0 0
  %313 = vperm.xlu0 %312, %v243
  %v314 = vpop.permute.xlu0 %313
  %317 = vset.pattern.permute.xlu0 0
  %318 = vperm.xlu0 %317, %v244
  %v319 = vpop.permute.xlu0 %318
  %322 = vset.pattern.permute.xlu0 0
  %323 = vperm.xlu0 %322, %v245
  %v324 = vpop.permute.xlu0 %323
  %v342 = vunpack.c.l.b16 %v210
  %v343 = vunpack.c.l.b16 %v211
  %v344 = vunpack.c.l.b16 %v212
  %v345 = vunpack.c.l.b16 %v213
  %v346 = vunpack.c.l.b16 %v214
  %v347 = vunpack.c.l.b16 %v215
  %v348 = vunpack.c.l.b16 %v216
  %v349 = vunpack.c.l.b16 %v217
  %v350 = vunpack.c.l.b16 %v218
  %v351 = vunpack.c.l.b16 %v219
  %v352 = vunpack.c.l.b16 %v220
  %v353 = vunpack.c.l.b16 %v221
  %v354 = vunpack.c.l.b16 %v222
  %v355 = vunpack.c.l.b16 %v223
  %v356 = vunpack.c.l.b16 %v224
  %v357 = vunpack.c.l.b16 %v225
  %v358 = vpack.c.b16 %v343, %v342
  %v359 = vpack.c.b16 %v345, %v344
  %v360 = vpack.c.b16 %v347, %v346
  %v361 = vpack.c.b16 %v349, %v348
  %v362 = vpack.c.b16 %v351, %v350
  %v363 = vpack.c.b16 %v353, %v352
  %v364 = vpack.c.b16 %v355, %v354
  %v365 = vpack.c.b16 %v357, %v356
  %vm366 = vcmask 523264
  %v368 = vsel %vm366, %v358, 0
  %v371 = vsel %vm366, %v359, 0
  %v374 = vsel %vm366, %v360, 0
  %v377 = vsel %vm366, %v361, 0
  %v380 = vsel %vm366, %v362, 0
  %v383 = vsel %vm366, %v363, 0
  %v386 = vsel %vm366, %v364, 0
  %v389 = vsel %vm366, %v365, 0
  %391 = vmatprep.subr.bf16.mxu0 0
  %392 = vmatpush1.bf16.msra.mxu0 %v226
  %393 = vmatprep.subr.bf16.mxu0 0
  %394 = vmatpush1.bf16.msra.mxu0 %v227
  %395 = vmatprep.subr.bf16.mxu0 0
  %396 = vmatpush1.bf16.msra.mxu0 %v228
  %397 = vmatprep.subr.bf16.mxu0 0
  %398 = vmatpush1.bf16.msra.mxu0 %v229
  %399 = vmatprep.subr.bf16.mxu0 0
  %400 = vmatpush1.bf16.msra.mxu0 0
  %401 = vmatprep.subr.bf16.mxu0 0
  %402 = vmatpush1.bf16.msra.mxu0 0
  %403 = vmatprep.subr.bf16.mxu0 0
  %404 = vmatpush1.bf16.msra.mxu0 0
  %405 = vmatprep.subr.bf16.mxu0 0
  %406 = vmatpush1.bf16.msra.mxu0 0
  %407 = vmatprep.subr.bf16.mxu0 0
  %408 = vmatpush1.bf16.msra.mxu0 0
  %409 = vmatprep.subr.bf16.mxu0 0
  %410 = vmatpush1.bf16.msra.mxu0 0
  %411 = vmatprep.subr.bf16.mxu0 0
  %412 = vmatpush1.bf16.msra.mxu0 0
  %413 = vmatprep.subr.bf16.mxu0 0
  %414 = vmatpush1.bf16.msra.mxu0 0
  %415 = vmatprep.subr.bf16.mxu0 0
  %416 = vmatpush1.bf16.msra.mxu0 0
  %417 = vmatprep.subr.bf16.mxu0 0
  %418 = vmatpush1.bf16.msra.mxu0 0
  %419 = vmatprep.subr.bf16.mxu0 0
  %420 = vmatpush1.bf16.msra.mxu0 0
  %421 = vmatprep.subr.bf16.mxu0 0
  %422 = vmatpush1.bf16.msra.mxu0 0
  %423 = vmatprep.mubr.bf16.mxu0 0
  %424 = vmatmul.mubr.bf16.gmra.mrb[0].mxu0 %v368
  %v425 = vpop.f32.mrb[0].mxu0
  %v426 = vadd.f32 %v249, %v425
  %v427 = vpop.f32.mrb[0].mxu0
  %v428 = vpop.f32.mrb[0].mxu0
  %v429 = vadd.f32 %v254, %v428
  %v430 = vpop.f32.mrb[0].mxu0
  %431 = vmatprep.mubr.bf16.mxu0 0
  %432 = vmatmul.mubr.bf16.gmra.mrb[0].mxu0 %v371
  %v433 = vpop.f32.mrb[0].mxu0
  %v434 = vadd.f32 %v259, %v433
  %v435 = vpop.f32.mrb[0].mxu0
  %v436 = vpop.f32.mrb[0].mxu0
  %v437 = vadd.f32 %v264, %v436
  %v438 = vpop.f32.mrb[0].mxu0
  %439 = vmatprep.mubr.bf16.mxu0 0
  %440 = vmatmul.mubr.bf16.gmra.mrb[0].mxu0 %v374
  %v441 = vpop.f32.mrb[0].mxu0
  %v442 = vadd.f32 %v269, %v441
  %v443 = vpop.f32.mrb[0].mxu0
  %v444 = vpop.f32.mrb[0].mxu0
  %v445 = vadd.f32 %v274, %v444
  %v446 = vpop.f32.mrb[0].mxu0
  %447 = vmatprep.mubr.bf16.mxu0 0
  %448 = vmatmul.mubr.bf16.gmra.mrb[0].mxu0 %v377
  %v449 = vpop.f32.mrb[0].mxu0
  %v450 = vadd.f32 %v279, %v449
  %v451 = vpop.f32.mrb[0].mxu0
  %v452 = vpop.f32.mrb[0].mxu0
  %v453 = vadd.f32 %v284, %v452
  %v454 = vpop.f32.mrb[0].mxu0
  %455 = vmatprep.mubr.bf16.mxu0 0
  %456 = vmatmul.mubr.bf16.gmra.mrb[0].mxu0 %v380
  %v457 = vpop.f32.mrb[0].mxu0
  %v458 = vadd.f32 %v289, %v457
  %v459 = vpop.f32.mrb[0].mxu0
  %v460 = vpop.f32.mrb[0].mxu0
  %v461 = vadd.f32 %v294, %v460
  %v462 = vpop.f32.mrb[0].mxu0
  %463 = vmatprep.mubr.bf16.mxu0 0
  %464 = vmatmul.mubr.bf16.gmra.mrb[0].mxu0 %v383
  %v465 = vpop.f32.mrb[0].mxu0
  %v466 = vadd.f32 %v299, %v465
  %v467 = vpop.f32.mrb[0].mxu0
  %v468 = vpop.f32.mrb[0].mxu0
  %v469 = vadd.f32 %v304, %v468
  %v470 = vpop.f32.mrb[0].mxu0
  %471 = vmatprep.mubr.bf16.mxu0 0
  %472 = vmatmul.mubr.bf16.gmra.mrb[0].mxu0 %v386
  %v473 = vpop.f32.mrb[0].mxu0
  %v474 = vadd.f32 %v309, %v473
  %v475 = vpop.f32.mrb[0].mxu0
  %v476 = vpop.f32.mrb[0].mxu0
  %v477 = vadd.f32 %v314, %v476
  %v478 = vpop.f32.mrb[0].mxu0
  %479 = vmatprep.mubr.bf16.mxu0 0
  %480 = vmatmul.mubr.bf16.gmra.mrb[0].mxu0 %v389
  %v481 = vpop.f32.mrb[0].mxu0
  %v482 = vadd.f32 %v319, %v481
  %v483 = vpop.f32.mrb[0].mxu0
  %v484 = vpop.f32.mrb[0].mxu0
  %v485 = vadd.f32 %v324, %v484
  %v486 = vpop.f32.mrb[0].mxu0
  %487 = vdwg.mxu0
  %v488 = vmax.f32 %v426, 0.0
  %v489 = vmax.f32 %v429, 0.0
  %v490 = vmax.f32 %v434, 0.0
  %v491 = vmax.f32 %v437, 0.0
  %v492 = vmax.f32 %v442, 0.0
  %v493 = vmax.f32 %v445, 0.0
  %v494 = vmax.f32 %v450, 0.0
  %v495 = vmax.f32 %v453, 0.0
  %v496 = vmax.f32 %v458, 0.0
  %v497 = vmax.f32 %v461, 0.0
  %v498 = vmax.f32 %v466, 0.0
  %v499 = vmax.f32 %v469, 0.0
  %v500 = vmax.f32 %v474, 0.0
  %v501 = vmax.f32 %v477, 0.0
  %v502 = vmax.f32 %v482, 0.0
  %v503 = vmax.f32 %v485, 0.0
  %v504 = vld [vmem:[%s5] sm:$0xf]
  %v505 = vld [vmem:[%s5 + $0x4] sm:$0xf]
  %v506 = vld [vmem:[%s5 + $0x8] sm:$0xf]
  %v507 = vld [vmem:[%s5 + $0xc] sm:$0xf]
  %v508 = vld [vmem:[%s5 + $0x10] sm:$0xf]
  %v509 = vld [vmem:[%s5 + $0x14] sm:$0xf]
  %v510 = vld [vmem:[%s5 + $0x18] sm:$0xf]
  %v511 = vld [vmem:[%s5 + $0x1c] sm:$0xf]
  %v512 = vpack.c.bf16 %v489, %v488
  %v513 = vpack.c.bf16 %v491, %v490
  %v514 = vpack.c.bf16 %v493, %v492
  %v515 = vpack.c.bf16 %v495, %v494
  %v516 = vpack.c.bf16 %v497, %v496
  %v517 = vpack.c.bf16 %v499, %v498
  %v518 = vpack.c.bf16 %v501, %v500
  %v519 = vpack.c.bf16 %v503, %v502
  %v520 = vld [vmem:[%s6] sm:$0xff]
  %v521 = vld [vmem:[%s6 + $0x8] sm:$0xff]
  %v522 = vld [vmem:[%s6 + $0x10] sm:$0xff]
  %v523 = vld [vmem:[%s6 + $0x18] sm:$0xff]
  %v524 = vld [vmem:[%s6 + $0x20] sm:$0xff]
  %v525 = vld [vmem:[%s6 + $0x28] sm:$0xff]
  %v526 = vld [vmem:[%s6 + $0x30] sm:$0xff]
  %v527 = vld [vmem:[%s6 + $0x38] sm:$0xff]
  %529 = vset.pattern.permute.xlu0 0
  %530 = vperm.xlu0 %529, %v520
  %v531 = vpop.permute.xlu0 %530
  %534 = vset.pattern.permute.xlu0 0
  %535 = vperm.xlu0 %534, %v521
  %v536 = vpop.permute.xlu0 %535
  %539 = vset.pattern.permute.xlu0 0
  %540 = vperm.xlu0 %539, %v522
  %v541 = vpop.permute.xlu0 %540
  %544 = vset.pattern.permute.xlu0 0
  %545 = vperm.xlu0 %544, %v523
  %v546 = vpop.permute.xlu0 %545
  %549 = vset.pattern.permute.xlu0 0
  %550 = vperm.xlu0 %549, %v524
  %v551 = vpop.permute.xlu0 %550
  %554 = vset.pattern.permute.xlu0 0
  %555 = vperm.xlu0 %554, %v525
  %v556 = vpop.permute.xlu0 %555
  %559 = vset.pattern.permute.xlu0 0
  %560 = vperm.xlu0 %559, %v526
  %v561 = vpop.permute.xlu0 %560
  %564 = vset.pattern.permute.xlu0 0
  %565 = vperm.xlu0 %564, %v527
  %v566 = vpop.permute.xlu0 %565
  %v576 = vunpack.c.l.b16 %v504
  %v577 = vunpack.c.l.b16 %v505
  %v578 = vunpack.c.l.b16 %v506
  %v579 = vunpack.c.l.b16 %v507
  %v580 = vunpack.c.l.b16 %v508
  %v581 = vunpack.c.l.b16 %v509
  %v582 = vunpack.c.l.b16 %v510
  %v583 = vunpack.c.l.b16 %v511
  %v584 = vpack.c.b16 %v577, %v576
  %v585 = vpack.c.b16 %v579, %v578
  %v586 = vpack.c.b16 %v581, %v580
  %v587 = vpack.c.b16 %v583, %v582
  %592 = vmatprep.subr.bf16.mxu0 0
  %593 = vmatpush1.bf16.msra.mxu0 %v512
  %594 = vmatprep.subr.bf16.mxu0 0
  %595 = vmatpush1.bf16.msra.mxu0 %v513
  %596 = vmatprep.subr.bf16.mxu0 0
  %597 = vmatpush1.bf16.msra.mxu0 %v514
  %598 = vmatprep.subr.bf16.mxu0 0
  %599 = vmatpush1.bf16.msra.mxu0 %v515
  %600 = vmatprep.subr.bf16.mxu0 0
  %601 = vmatpush1.bf16.msra.mxu0 %v516
  %602 = vmatprep.subr.bf16.mxu0 0
  %603 = vmatpush1.bf16.msra.mxu0 %v517
  %604 = vmatprep.subr.bf16.mxu0 0
  %605 = vmatpush1.bf16.msra.mxu0 %v518
  %606 = vmatprep.subr.bf16.mxu0 0
  %607 = vmatpush1.bf16.msra.mxu0 %v519
  %608 = vmatprep.subr.bf16.mxu0 0
  %609 = vmatpush1.bf16.msra.mxu0 0
  %610 = vmatprep.subr.bf16.mxu0 0
  %611 = vmatpush1.bf16.msra.mxu0 0
  %612 = vmatprep.subr.bf16.mxu0 0
  %613 = vmatpush1.bf16.msra.mxu0 0
  %614 = vmatprep.subr.bf16.mxu0 0
  %615 = vmatpush1.bf16.msra.mxu0 0
  %616 = vmatprep.subr.bf16.mxu0 0
  %617 = vmatpush1.bf16.msra.mxu0 0
  %618 = vmatprep.subr.bf16.mxu0 0
  %619 = vmatpush1.bf16.msra.mxu0 0
  %620 = vmatprep.subr.bf16.mxu0 0
  %621 = vmatpush1.bf16.msra.mxu0 0
  %622 = vmatprep.subr.bf16.mxu0 0
  %623 = vmatpush1.bf16.msra.mxu0 0
  %624 = vmatprep.mubr.bf16.mxu0 0
  %625 = vmatmul.mubr.bf16.gmra.mrb[0].mxu0 %v584
  %v626 = vpop.f32.mrb[0].mxu0
  %v627 = vadd.f32 %v531, %v626
  %v628 = vpop.f32.mrb[0].mxu0
  %v629 = vpop.f32.mrb[0].mxu0
  %v630 = vadd.f32 %v536, %v629
  %v631 = vpop.f32.mrb[0].mxu0
  %632 = vmatprep.mubr.bf16.mxu0 0
  %633 = vmatmul.mubr.bf16.gmra.mrb[0].mxu0 %v585
  %v634 = vpop.f32.mrb[0].mxu0
  %v635 = vadd.f32 %v541, %v634
  %v636 = vpop.f32.mrb[0].mxu0
  %v637 = vpop.f32.mrb[0].mxu0
  %v638 = vadd.f32 %v546, %v637
  %v639 = vpop.f32.mrb[0].mxu0
  %640 = vmatprep.mubr.bf16.mxu0 0
  %641 = vmatmul.mubr.bf16.gmra.mrb[0].mxu0 %v586
  %v642 = vpop.f32.mrb[0].mxu0
  %v643 = vadd.f32 %v551, %v642
  %v644 = vpop.f32.mrb[0].mxu0
  %v645 = vpop.f32.mrb[0].mxu0
  %v646 = vadd.f32 %v556, %v645
  %v647 = vpop.f32.mrb[0].mxu0
  %648 = vmatprep.mubr.bf16.mxu0 0
  %649 = vmatmul.mubr.bf16.gmra.mrb[0].mxu0 %v587
  %v650 = vpop.f32.mrb[0].mxu0
  %v651 = vadd.f32 %v561, %v650
  %v652 = vpop.f32.mrb[0].mxu0
  %v653 = vpop.f32.mrb[0].mxu0
  %v654 = vadd.f32 %v566, %v653
  %v655 = vpop.f32.mrb[0].mxu0
  %656 = vdwg.mxu0
  %v657 = vmax.f32 %v627, 0.0
  %v658 = vmax.f32 %v630, 0.0
  %v659 = vmax.f32 %v635, 0.0
  %v660 = vmax.f32 %v638, 0.0
  %v661 = vmax.f32 %v643, 0.0
  %v662 = vmax.f32 %v646, 0.0
  %v663 = vmax.f32 %v651, 0.0
  %v664 = vmax.f32 %v654, 0.0
  %v665 = vld [vmem:[%s7] sm:$0xf]
  %v666 = vpack.c.bf16 %v658, %v657
  %v667 = vpack.c.bf16 %v660, %v659
  %v668 = vpack.c.bf16 %v662, %v661
  %v669 = vpack.c.bf16 %v664, %v663
  %v670 = vld [vmem:[%s8] sm:$0xff]
  %672 = vset.pattern.permute.xlu0 0
  %673 = vperm.xlu0 %672, %v670
  %v674 = vpop.permute.xlu0 %673
  %v677 = vsel %vm366, %v665, 0
  %679 = vmatprep.subr.bf16.mxu0 0
  %680 = vmatpush1.bf16.msra.mxu0 %v666
  %681 = vmatprep.subr.bf16.mxu0 0
  %682 = vmatpush1.bf16.msra.mxu0 %v667
  %683 = vmatprep.subr.bf16.mxu0 0
  %684 = vmatpush1.bf16.msra.mxu0 %v668
  %685 = vmatprep.subr.bf16.mxu0 0
  %686 = vmatpush1.bf16.msra.mxu0 %v669
  %687 = vmatprep.subr.bf16.mxu0 0
  %688 = vmatpush1.bf16.msra.mxu0 0
  %689 = vmatprep.subr.bf16.mxu0 0
  %690 = vmatpush1.bf16.msra.mxu0 0
  %691 = vmatprep.subr.bf16.mxu0 0
  %692 = vmatpush1.bf16.msra.mxu0 0
  %693 = vmatprep.subr.bf16.mxu0 0
  %694 = vmatpush1.bf16.msra.mxu0 0
  %695 = vmatprep.subr.bf16.mxu0 0
  %696 = vmatpush1.bf16.msra.mxu0 0
  %697 = vmatprep.subr.bf16.mxu0 0
  %698 = vmatpush1.bf16.msra.mxu0 0
  %699 = vmatprep.subr.bf16.mxu0 0
  %700 = vmatpush1.bf16.msra.mxu0 0
  %701 = vmatprep.subr.bf16.mxu0 0
  %702 = vmatpush1.bf16.msra.mxu0 0
  %703 = vmatprep.subr.bf16.mxu0 0
  %704 = vmatpush1.bf16.msra.mxu0 0
  %705 = vmatprep.subr.bf16.mxu0 0
  %706 = vmatpush1.bf16.msra.mxu0 0
  %707 = vmatprep.subr.bf16.mxu0 0
  %708 = vmatpush1.bf16.msra.mxu0 0
  %709 = vmatprep.subr.bf16.mxu0 0
  %710 = vmatpush1.bf16.msra.mxu0 0
  %711 = vmatprep.mubr.bf16.mxu0 0
  %712 = vmatmul.mubr.bf16.gmra.mrb[0].mxu0 %v677
  %v713 = vpop.f32.mrb[0].mxu0
  %v714 = vadd.f32 %v674, %v713
  %v715 = vpop.f32.mrb[0].mxu0
  %v716 = vpop.f32.mrb[0].mxu0
  %v717 = vpop.f32.mrb[0].mxu0
  %718 = vdwg.mxu0
  %719 = vst [vmem:[%s9] sm:$0xff] %v714
  // Predicated region
  $region38: #{bcnet_forward.1} parent=0 // pred_check
    _
  $region39: #{bcnet_forward.1} parent=0 // pred_check_branch
    %721 = sbr.rel (0) target = $region41
  $region40: #{bcnet_forward.1} parent=0 // pred_region
    _
  $region41: #{bcnet_forward.1} parent=0 // pred_fallthru
    _
  // Predicated region
  $region42: #{bcnet_forward.1} parent=0 // pred_check
    _
  $region43: #{bcnet_forward.1} parent=0 // pred_check_branch
    %723 = sbr.rel (0) target = $region45
  $region44: #{bcnet_forward.1} parent=0 // pred_region
    _
  $region45: #{bcnet_forward.1} parent=0 // pred_fallthru
    _

</llo_original>
